<compile_context>
chip_gen: v7x
topology: tpu7x:2x2x1
jax: 0.10.0
libtpu: 0.0.40
codegen_flags: <defaults>
</compile_context>

<pallas_src>
import jax
import jax.numpy as jnp
from jax.experimental import pallas as pl
from jax.experimental.pallas import tpu as pltpu


def _dt_kernel(x1_ref, x2_ref, o_ref):
    # Elementwise absolute difference on the current VMEM tile (VPU only,
    # trivially hidden under the HBM<->VMEM DMA).
    o_ref[...] = jnp.abs(x1_ref[...] - x2_ref[...])


def _round_up(x, m):
    return ((x + m - 1) // m) * m


def _default_tile_bytes():
    """Per-operand tile size tuned per TPU generation (see perf review)."""
    try:
        kind = jax.devices()[0].device_kind.lower()
    except Exception:
        kind = ""
    if "v7" in kind:
        return 5 << 20   # 3 ops x 2 bufs x 5 MiB = 30 MiB, inside v7x's 64 MiB VMEM
    if "v6" in kind:
        return 4 << 20   # 24 MiB working set, under the 32 MiB scoped default
    return 2 << 20       # v5e & unknown: 12 MiB working set, safe everywhere


def dt_forward(x1, x2, *, min_kernel_bytes=1 << 20, target_tile_bytes=None):
    """Pallas implementation of DT.forward: elementwise abs(x1 - x2)."""
    assert x1.shape == x2.shape, "DT requires matching shapes"
    assert x1.dtype == x2.dtype, "DT requires matching dtypes"
    orig_shape = x1.shape
    dtype = x1.dtype
    itemsize = jnp.dtype(dtype).itemsize
    n = int(x1.size)

    # Small inputs / unsupported element widths: the fused XLA op is optimal.
    if n == 0 or n * itemsize < min_kernel_bytes or itemsize not in (1, 2, 4):
        return jnp.abs(x1 - x2)

    # Pick the widest lane width that divides n exactly -> no padding, and the
    # reshape below is a free (metadata-only) view of the contiguous slab.
    lane = 0
    for cand in (1024, 512, 256, 128):
        if n % cand == 0:
            lane = cand
            break
    if lane == 0:
        # A kernel here would need a full pad of both inputs + an output slice
        # (~2-3x extra HBM traffic); the fused XLA op is strictly better.
        return jnp.abs(x1 - x2)

    sublane = {4: 8, 2: 16, 1: 32}[itemsize]
    rows = n // lane

    if target_tile_bytes is None:
        target_tile_bytes = _default_tile_bytes()

    # Tile rows: ~target_tile_bytes per operand, dtype-aware sublane multiple,
    # never larger than the (sublane-rounded) array itself.
    tr = _round_up(max(sublane, target_tile_bytes // (itemsize * lane)), sublane)
    if rows < sublane:
        tr = rows                      # block == full array dim (allowed form)
    else:
        tr = min(tr, _round_up(rows, sublane))

    grid = pl.cdiv(rows, tr)
    if rows >= 2 * sublane:
        # Best-effort even step count so v7x's two TensorCores split evenly.
        # TODO(synk): verify "parallel" shards the axis across both v7x TCs;
        # if not, switch to pltpu.CORE_PARALLEL / a core_map leading axis.
        if grid < 2:
            tr = _round_up(pl.cdiv(rows, 2), sublane)
            grid = pl.cdiv(rows, tr)
        elif grid % 2:
            tr = _round_up(pl.cdiv(rows, grid + 1), sublane)
            grid = pl.cdiv(rows, tr)

    # Free reshapes (contiguous, row-major).
    x1s = x1.reshape(rows, lane)
    x2s = x2.reshape(rows, lane)

    # Explicit VMEM budget: 3 operands x 2 pipeline buffers x tile, + headroom.
    vmem_needed = 3 * 2 * tr * lane * itemsize
    vmem_limit = max(16 << 20, vmem_needed + (8 << 20))

    cost = pl.CostEstimate(
        flops=2 * n,                       # subtract + abs
        transcendentals=0,
        bytes_accessed=3 * n * itemsize,   # exact: no padding anywhere
    )

    out = pl.pallas_call(
        _dt_kernel,
        out_shape=jax.ShapeDtypeStruct((rows, lane), dtype),
        grid_spec=pltpu.PrefetchScalarGridSpec(
            num_scalar_prefetch=0,
            grid=(grid,),
            in_specs=[
                pl.BlockSpec((tr, lane), lambda i: (i, 0)),
                pl.BlockSpec((tr, lane), lambda i: (i, 0)),
            ],
            out_specs=pl.BlockSpec((tr, lane), lambda i: (i, 0)),
        ),
        compiler_params=pltpu.CompilerParams(
            dimension_semantics=("parallel",),
            vmem_limit_bytes=vmem_limit,
        ),
        cost_estimate=cost,
    )(x1s, x2s)

    return out.reshape(orig_shape)


if __name__ == "__main__":
    key = jax.random.PRNGKey(0)
    k1, k2, k3, k4 = jax.random.split(key, 4)

    # 1) Small NCHW input (module-typical size) -> fused-XLA fast path.
    x1 = jax.random.normal(k1, (2, 4, 16, 16), dtype=jnp.float32)
    x2 = jax.random.normal(k2, (2, 4, 16, 16), dtype=jnp.float32)
    ref_small = jnp.abs(x1 - x2)
    out_small = jax.block_until_ready(dt_forward(x1, x2))
    assert out_small.shape == ref_small.shape and out_small.dtype == ref_small.dtype
    assert jnp.allclose(out_small, ref_small)

    # 2) Same small input forced through the Pallas kernel (lane-dense slab,
    #    single partial block, no padding anywhere).
    out_forced = jax.block_until_ready(dt_forward(x1, x2, min_kernel_bytes=0))
    assert jnp.array_equal(out_forced, ref_small)

    # 3) ~2 MiB f32 with a non-128 last dim (257): total size is still a
    #    multiple of 1024, so the kernel runs with zero pad/slice copies and a
    #    (possibly ragged) multi-step grid.
    y1 = jax.random.normal(k3, (2, 8, 128, 257), dtype=jnp.float32)
    y2 = jax.random.normal(k4, (2, 8, 128, 257), dtype=jnp.float32)
    out_big = jax.block_until_ready(dt_forward(y1, y2))
    ref_big = jnp.abs(y1 - y2)
    assert out_big.shape == ref_big.shape and out_big.dtype == ref_big.dtype
    assert jnp.allclose(out_big, ref_big)

    # 4) bf16 through the kernel (sublane multiple 16, even two-step grid).
    z1 = jax.random.normal(k3, (2, 4, 64, 64), dtype=jnp.bfloat16)
    z2 = jax.random.normal(k4, (2, 4, 64, 64), dtype=jnp.bfloat16)
    out_bf16 = jax.block_until_ready(dt_forward(z1, z2, min_kernel_bytes=0))
    ref_bf16 = jnp.abs(z1 - z2)
    assert out_bf16.dtype == ref_bf16.dtype
    assert jnp.array_equal(out_bf16, ref_bf16)

    # 5) Size not divisible by 128 -> documented XLA fallback (no pad copies).
    w1 = jax.random.normal(k1, (3, 5, 7, 11), dtype=jnp.float32)
    w2 = jax.random.normal(k2, (3, 5, 7, 11), dtype=jnp.float32)
    out_odd = jax.block_until_ready(dt_forward(w1, w2, min_kernel_bytes=0))
    assert jnp.allclose(out_odd, jnp.abs(w1 - w2))

    print("KERNEL_OK")
</pallas_src>

<mosaic_0001>
module attributes {stable_mosaic.version = 11 : i64} {
  func.func @_dt_kernel(%arg0: i32, %arg1: memref<2x1024xf32, #tpu.memory_space<vmem>>, %arg2: memref<2x1024xf32, #tpu.memory_space<vmem>>, %arg3: memref<2x1024xf32, #tpu.memory_space<vmem>>) attributes {dimension_semantics = [#tpu.dimension_semantics<parallel>], iteration_bounds = array<i64: 1>, scalar_prefetch = 0 : i64, scratch_operands = 0 : i64, tpu.core_type = #tpu.core_type<tc>, window_params = [{transform_indices = @transform_0, window_bounds = array<i64: 2, 1024>}, {transform_indices = @transform_1, window_bounds = array<i64: 2, 1024>}, {transform_indices = @transform_2, window_bounds = array<i64: 2, 1024>}]} {
    %c0 = arith.constant 0 : index
    %c0_0 = arith.constant 0 : index
    %0 = vector.load %arg1[%c0, %c0_0] : memref<2x1024xf32, #tpu.memory_space<vmem>>, vector<2x1024xf32>
    %c0_1 = arith.constant 0 : index
    %c0_2 = arith.constant 0 : index
    %1 = vector.load %arg2[%c0_1, %c0_2] : memref<2x1024xf32, #tpu.memory_space<vmem>>, vector<2x1024xf32>
    %2 = arith.subf %0, %1 : vector<2x1024xf32>
    %3 = math.absf %2 : vector<2x1024xf32>
    %c0_3 = arith.constant 0 : index
    %c0_4 = arith.constant 0 : index
    %4 = vector.load %arg3[%c0_3, %c0_4] : memref<2x1024xf32, #tpu.memory_space<vmem>>, vector<2x1024xf32>
    tpu.vector_store %arg3[%c0_3, %c0_4], %3 {strides = array<i32>} : memref<2x1024xf32, #tpu.memory_space<vmem>>, vector<2x1024xf32>,
    return
  }
  func.func @transform_0(%arg0: i32) -> (i32, i32) {
    %c0_i32 = arith.constant 0 : i32
    %c0_i32_0 = arith.constant 0 : i32
    return %arg0, %c0_i32 : i32, i32
  }
  func.func @transform_1(%arg0: i32) -> (i32, i32) {
    %c0_i32 = arith.constant 0 : i32
    %c0_i32_0 = arith.constant 0 : i32
    return %arg0, %c0_i32 : i32, i32
  }
  func.func @transform_2(%arg0: i32) -> (i32, i32) {
    %c0_i32 = arith.constant 0 : i32
    %c0_i32_0 = arith.constant 0 : i32
    return %arg0, %c0_i32 : i32, i32
  }
}

</mosaic_0001>

<llo_original>
// kernel: tpu_custom_call.1
$region0: #{tpu_custom_call.1}
  #allocation0 [shape = 'u32[]', space=smem, size = 0x4, offset = 0x4, fixed_abs, tag = 'smem constant byte address 0x4 - core index']
  #allocation1 [shape = 'u32[144,128]{1,0:T(1,128)}', space=vmem, size = 0x12000, scoped, tag = 'internal scratch']
  %s0 = inlined_call_operand.hbm [shape: f32[2,1024], index: 0, kind: input, shape index: {}]
  %s1 = inlined_call_operand.hbm [shape: f32[2,1024], index: 1, kind: input, shape index: {}]
  %s2 = inlined_call_operand.hbm [shape: f32[2,1024], index: 2, kind: output, shape index: {}]
  %s3 = sld [smem:[#allocation0]]
  $region26: #{tpu_custom_call.1} parent=0
    _
  %s5 = ssub.s32 1, %s3
  %s6 = scalar_select 0, %s5, %s3
  $region1: #{tpu_custom_call.1} parent=0
    #allocation2 [shape = 'u8[8192]{0}', space=vmem, size = 0x2000, scoped, tag = 'input window, operand 0, single buffered']
    #allocation3 [shape = 's32[1]{0}', space=sflag, size = 0x4, scoped, tag = 'scoped memory for tpu_custom_call.1']
    #allocation4 [shape = 's32[1]{0}', space=sflag, size = 0x4, scoped, tag = 'scoped memory for tpu_custom_call.1']
    #allocation5 [shape = 'u8[8192]{0}', space=vmem, size = 0x2000, scoped, tag = 'input window, operand 1, single buffered']
    #allocation6 [shape = 's32[1]{0}', space=sflag, size = 0x4, scoped, tag = 'scoped memory for tpu_custom_call.1']
    #allocation7 [shape = 'u8[8192]{0}', space=vmem, size = 0x2000, scoped, tag = 'output window, operand 0, single buffered']
    %7 = vsyncpa [#allocation3], 0
    %8 = vsyncpa [#allocation6], 0
    %9 = vsyncpa [#allocation4], 0
    // Predicated region
    $region2: #{tpu_custom_call.1} parent=1 // pred_check
      _
    $region3: #{tpu_custom_call.1} parent=1 // pred_check_branch
      %11 = sbr.rel (0) target = $region5
    $region4: #{tpu_custom_call.1} parent=1 // pred_region
      %s13 = ssub.s32 256, 256
      %14 = vsyncadd [#allocation3], %s13
      %s16 = sshll.u32 [#allocation2], 4
      %s17 = int_to_ptr.vmem [resolvable:$true] %s16
      %19 = dma.hbm_to_vmem [thread:$0]  %s0, 256, %s17, [#allocation3]
    $region5: #{tpu_custom_call.1} parent=1 // pred_fallthru
      _
    // Predicated region
    $region6: #{tpu_custom_call.1} parent=1 // pred_check
      _
    $region7: #{tpu_custom_call.1} parent=1 // pred_check_branch
      %21 = sbr.rel (0) target = $region9
    $region8: #{tpu_custom_call.1} parent=1 // pred_region
      %s23 = ssub.s32 256, 256
      %24 = vsyncadd [#allocation6], %s23
      %s26 = sshll.u32 [#allocation5], 4
      %s27 = int_to_ptr.vmem [resolvable:$true] %s26
      %29 = dma.hbm_to_vmem [thread:$0]  %s1, 256, %s27, [#allocation6]
    $region9: #{tpu_custom_call.1} parent=1 // pred_fallthru
      _
    // Predicated region
    $region10: #{tpu_custom_call.1} parent=1 // pred_check
      _
    $region11: #{tpu_custom_call.1} parent=1 // pred_check_branch
      %31 = sbr.rel (0) target = $region13
    $region12: #{tpu_custom_call.1} parent=1 // pred_region
      %32 = dma.done [#allocation3], 256
    $region13: #{tpu_custom_call.1} parent=1 // pred_fallthru
      _
    // Predicated region
    $region14: #{tpu_custom_call.1} parent=1 // pred_check
      _
    $region15: #{tpu_custom_call.1} parent=1 // pred_check_branch
      %34 = sbr.rel (0) target = $region17
    $region16: #{tpu_custom_call.1} parent=1 // pred_region
      %35 = dma.done [#allocation6], 256
    $region17: #{tpu_custom_call.1} parent=1 // pred_fallthru
      _
    %v36 = vld [vmem:[#allocation2] sm:$0xff]
    %v37 = vld [vmem:[#allocation2 + $0x8] sm:$0xff]
    %v38 = vld [vmem:[#allocation5] sm:$0xff]
    %v39 = vld [vmem:[#allocation5 + $0x8] sm:$0xff]
    %v40 = vsub.f32 %v36, %v38
    %v41 = vsub.f32 %v37, %v39
    %v42 = vand.u32 2147483647, %v40
    %v43 = vand.u32 2147483647, %v41
    %44 = vst [vmem:[#allocation7] sm:$0xff] %v42
    %45 = vst [vmem:[#allocation7 + $0x8] sm:$0xff] %v43
    // Predicated region
    $region18: #{tpu_custom_call.1} parent=1 // pred_check
      _
    $region19: #{tpu_custom_call.1} parent=1 // pred_check_branch
      %47 = sbr.rel (0) target = $region21
    $region20: #{tpu_custom_call.1} parent=1 // pred_region
      %s49 = ssub.s32 256, 256
      %50 = vsyncadd [#allocation4], %s49
      %s52 = sshll.u32 [#allocation7], 4
      %s53 = int_to_ptr.vmem [resolvable:$true] %s52
      %55 = dma.vmem_to_hbm [thread:$0]  %s53, 256, %s2, [#allocation4]
    $region21: #{tpu_custom_call.1} parent=1 // pred_fallthru
      _
    // Predicated region
    $region22: #{tpu_custom_call.1} parent=1 // pred_check
      _
    $region23: #{tpu_custom_call.1} parent=1 // pred_check_branch
      %57 = sbr.rel (0) target = $region25
    $region24: #{tpu_custom_call.1} parent=1 // pred_region
      %58 = dma.done [#allocation4], 256
    $region25: #{tpu_custom_call.1} parent=1 // pred_fallthru
      _
    %59 = vsyncpa [#allocation3], 1
    %60 = vsyncpa [#allocation6], 1
    %61 = vsyncpa [#allocation4], 1

</llo_original>
